<compile_context>
chip_gen: v6e
topology: v6e:2x2x1
jax: 0.10.0
libtpu: 0.0.40
codegen_flags: <defaults>
</compile_context>

<pallas_src>
import math

import jax
import jax.numpy as jnp
from jax.experimental import pallas as pl
from jax.experimental.pallas import tpu as pltpu


# ----------------------------------------------------------------------------
# Kernel 1: scores = sigmoid(h @ w^T + b), lane-dense (1, B*N) output
# ----------------------------------------------------------------------------
def _score_kernel(b_ref, x_ref, w_ref, s_ref):
    # b_ref: SMEM f32[1] bias; x_ref: (TM, D) activations; w_ref: (1, D) weight
    # s_ref: (1, TM) lane-dense scores (unmasked vst, no 128x lane padding).
    z = jnp.sum(x_ref[...] * w_ref[...], axis=-1)            # (TM,) VPU mul + reduce
    s_ref[...] = jax.nn.sigmoid(z + b_ref[0])[None, :]       # (1, TM) lane-dense store


def _row_tile(num_rows, d):
    # ~1-2 MiB of activations per grid step (the kernel is purely memory
    # bound); multiples of 512 keep both the (TM, D) input tile and the
    # (1, TM) lane-dense output tile legal when the row axis is split.
    tm = (2 << 20) // max(4 * d, 1)
    tm = max(512, min(tm, 8192))
    tm = (tm // 512) * 512
    return num_rows if num_rows <= tm else tm


def proj_sigmoid(x2d, w, b):
    """x2d: (B*N, D) f32, w: (1, D), b: (1,) -> scores (B*N,) f32."""
    bt, d = x2d.shape
    tm = _row_tile(bt, d)
    grid = (pl.cdiv(bt, tm),)
    vmem_limit = int(min(max(4 * tm * d * 4 + (2 << 20), 8 << 20), 32 << 20))
    scores = pl.pallas_call(
        _score_kernel,
        out_shape=jax.ShapeDtypeStruct((1, bt), jnp.float32),
        grid=grid,
        in_specs=[
            pl.BlockSpec(memory_space=pltpu.MemorySpace.SMEM),   # bias scalar
            pl.BlockSpec((tm, d), lambda i: (i, 0)),             # activation tile
            pl.BlockSpec((1, d), lambda i: (0, 0)),              # resident weight
        ],
        out_specs=pl.BlockSpec((1, tm), lambda i: (0, i)),       # lane-dense scores
        compiler_params=pltpu.CompilerParams(
            dimension_semantics=("parallel",),
            vmem_limit_bytes=vmem_limit),
        cost_estimate=pl.CostEstimate(
            flops=2 * bt * d,
            transcendentals=bt,
            bytes_accessed=bt * d * 4 + d * 4 + 4 + bt * 4),
    )(b, x2d, w)
    return scores.reshape(bt)


# ----------------------------------------------------------------------------
# Kernel 2: index-driven row gather + scale by the top-k values
# ----------------------------------------------------------------------------
_DMA_QUEUE_DEPTH = 8     # bounded number of in-flight gathered-row DMAs


def _gather_rows_per_step(total_rows, d):
    # Chunk the flattened (B * n_keep) output-row axis: coarse enough to
    # amortize the ~0.35us/step pipeline overhead, small enough that the row
    # buffer stays tiny even on v7x (64 MiB VMEM).  Multiple of 8 keeps the
    # (rows, 1) / (rows, D) block shapes legal when the axis is split.
    rows = max(8, (512 << 10) // max(4 * d, 1))
    rows = min(rows, 256)
    rows = (rows // 8) * 8
    return total_rows if total_rows <= rows else rows


def topk_gather_scale(gidx, vals, h2d):
    """out[r, :] = h2d[gidx[r], :] * vals[r, 0]

    gidx: (R,) int32 flattened selected-row ids (R = B * n_keep), kept in SMEM.
    vals: (R, 1) f32 top-k score values (tiny; avoids re-reading all scores).
    h2d : (B*N, D) f32 features, left in HBM: only the R selected rows are
          DMA'd instead of all N rows per batch.
    """
    total_rows = int(gidx.shape[0])
    _bt, d = h2d.shape
    rows = _gather_rows_per_step(total_rows, d)
    grid = (pl.cdiv(total_rows, rows),)

    def kernel(gidx_ref, val_ref, h_ref, o_ref, buf, sems):
        # gidx_ref: SMEM (R,) int32 ; val_ref: (rows, 1) f32 ; h_ref: HBM (B*N, D)
        # o_ref: (rows, D) out block ; buf: VMEM (rows, D) ; sems: DMA (QD,)
        n_rows = buf.shape[0]
        qd = sems.shape[0]
        base = pl.program_id(0) * n_rows

        def row_copy(r):
            # Clamp so the ragged final chunk never reads gidx / issues a DMA
            # out of bounds (its extra rows are masked on output write-back).
            rr = jnp.minimum(base + r, total_rows - 1)
            return pltpu.make_async_copy(
                h_ref.at[gidx_ref[rr]], buf.at[r], sems.at[r % qd])

        @pl.loop(0, min(qd, n_rows))
        def _prime(r):
            row_copy(r).start()

        @pl.loop(0, n_rows)
        def _gather(r):
            row_copy(r).wait()

            @pl.when(r + qd < n_rows)
            def _():
                row_copy(r + qd).start()

        o_ref[...] = buf[...] * val_ref[...]

    vmem_limit = int(min(max(6 * rows * d * 4 + (2 << 20), 8 << 20), 32 << 20))
    return pl.pallas_call(
        kernel,
        out_shape=jax.ShapeDtypeStruct((total_rows, d), jnp.float32),
        grid=grid,
        in_specs=[
            pl.BlockSpec(memory_space=pltpu.MemorySpace.SMEM),   # selected row ids
            pl.BlockSpec((rows, 1), lambda c: (c, 0)),           # top-k values
            pl.BlockSpec(memory_space=pl.ANY),                   # features stay in HBM
        ],
        out_specs=pl.BlockSpec((rows, d), lambda c: (c, 0)),
        scratch_shapes=[
            pltpu.VMEM((rows, d), jnp.float32),                  # gathered rows
            pltpu.SemaphoreType.DMA((_DMA_QUEUE_DEPTH,)),        # in-flight copies
        ],
        compiler_params=pltpu.CompilerParams(
            dimension_semantics=("parallel",),
            vmem_limit_bytes=vmem_limit),
        cost_estimate=pl.CostEstimate(
            flops=total_rows * d,
            transcendentals=0,
            bytes_accessed=2 * total_rows * d * 4 + total_rows * 8),
    )(gidx, vals, h2d)


# ----------------------------------------------------------------------------
# Parameter init (matches nn.Linear(in_dim, 1) defaults) and forward
# ----------------------------------------------------------------------------
def init_params(key, in_dim):
    bound = 1.0 / math.sqrt(in_dim)
    kw, kb = jax.random.split(key)
    w = jax.random.uniform(kw, (1, in_dim), jnp.float32, -bound, bound)
    b = jax.random.uniform(kb, (1,), jnp.float32, -bound, bound)
    return {"proj_w": w, "proj_b": b}


def graph_pool_forward(params, h, k):
    """h: (B, N, D) node features; k: keep ratio. Returns (B, max(int(N*k),1), D)."""
    b_sz, n_nodes, d = h.shape
    h = h.astype(jnp.float32)
    h2d = h.reshape(b_sz * n_nodes, d)

    # scores = sigmoid(proj(dropout(h))); dropout == identity (inference).
    scores = proj_sigmoid(h2d, params["proj_w"], params["proj_b"]).reshape(b_sz, n_nodes)

    n_keep = max(int(n_nodes * k), 1)
    # Top-k node selection (descending).  The values are reused as the gather
    # scale so kernel 2 never re-reads (or re-scales with) the score tensor.
    vals, idx = jax.lax.top_k(scores, n_keep)                          # (B, n_keep)
    gidx = (idx.astype(jnp.int32)
            + (jnp.arange(b_sz, dtype=jnp.int32) * n_nodes)[:, None]).reshape(-1)
    vals2 = vals.reshape(b_sz * n_keep, 1)

    out2d = topk_gather_scale(gidx, vals2, h2d)                        # (B*n_keep, D)
    return out2d.reshape(b_sz, n_keep, d)


def graph_pool_ref(params, h, k):
    """Pure-JAX replica of the PyTorch forward (for verification)."""
    h = h.astype(jnp.float32)
    scores = jax.nn.sigmoid(
        jnp.einsum("bnd,od->bno", h, params["proj_w"]) + params["proj_b"])   # (B, N, 1)
    n_keep = max(int(h.shape[1] * k), 1)
    _, idx = jax.lax.top_k(scores[:, :, 0], n_keep)
    hs = h * scores
    return jnp.take_along_axis(hs, idx[:, :, None], axis=1)


if __name__ == "__main__":
    key = jax.random.PRNGKey(0)
    k_p1, k_d1, k_p2, k_d2 = jax.random.split(key, 4)

    # --- small config (module-sized example) ---------------------------------
    B, N, D = 2, 16, 32
    K_RATIO = 0.5
    params = init_params(k_p1, D)
    h = jax.random.normal(k_d1, (B, N, D), dtype=jnp.float32)

    out = jax.block_until_ready(graph_pool_forward(params, h, K_RATIO))
    n_keep = max(int(N * K_RATIO), 1)
    assert out.shape == (B, n_keep, D), out.shape
    assert bool(jnp.all(jnp.isfinite(out)))
    ref = graph_pool_ref(params, h, K_RATIO)
    assert jnp.allclose(out, ref, atol=1e-5, rtol=1e-5)

    # --- larger config: exercises multi-tile scores, multi-chunk gather grid,
    #     ragged final chunk and the clamped tail DMAs -------------------------
    B2, N2, D2, K2 = 8, 1200, 32, 0.45
    params2 = init_params(k_p2, D2)
    h2 = jax.random.normal(k_d2, (B2, N2, D2), dtype=jnp.float32)
    nk2 = max(int(N2 * K2), 1)

    out2 = jax.block_until_ready(graph_pool_forward(params2, h2, K2))
    assert out2.shape == (B2, nk2, D2), out2.shape
    assert bool(jnp.all(jnp.isfinite(out2)))

    # Kernel 1 check: elementwise (order-insensitive), against pure JAX.
    s_ker = proj_sigmoid(h2.reshape(B2 * N2, D2),
                         params2["proj_w"], params2["proj_b"]).reshape(B2, N2)
    s_ref = jax.nn.sigmoid(
        jnp.einsum("bnd,d->bn", h2, params2["proj_w"][0]) + params2["proj_b"][0])
    assert jnp.allclose(s_ker, s_ref, atol=1e-5, rtol=1e-5)
    # Kernel 2 check: against the selection actually used (lax.top_k itself is
    # stock JAX; avoids spurious mismatches from float-level score ties).
    v2, i2 = jax.lax.top_k(s_ker, nk2)
    ref2 = jnp.take_along_axis(h2, i2[..., None], axis=1) * v2[..., None]
    assert jnp.allclose(out2, ref2, atol=1e-5, rtol=1e-5)

    print("KERNEL_OK")
</pallas_src>

<mosaic_0001>
module attributes {stable_mosaic.version = 11 : i64} {
  func.func @_score_kernel(%arg0: i32, %arg1: memref<1xf32, #tpu.memory_space<smem>>, %arg2: memref<32x32xf32, #tpu.memory_space<vmem>>, %arg3: memref<1x32xf32, #tpu.memory_space<vmem>>, %arg4: memref<1x32xf32, #tpu.memory_space<vmem>>) attributes {dimension_semantics = [#tpu.dimension_semantics<parallel>], iteration_bounds = array<i64: 1>, scalar_prefetch = 0 : i64, scratch_operands = 0 : i64, tpu.core_type = #tpu.core_type<tc>, window_params = [{transform_indices = @transform_0, window_bounds = array<i64: 1>}, {transform_indices = @transform_1, window_bounds = array<i64: 32, 32>}, {pipeline_mode = #tpu.pipeline_mode<synchronous>, transform_indices = @transform_2, window_bounds = array<i64: 1, 32>}, {transform_indices = @transform_3, window_bounds = array<i64: 1, 32>}]} {
    %c0 = arith.constant 0 : index
    %c0_0 = arith.constant 0 : index
    %0 = vector.load %arg2[%c0, %c0_0] : memref<32x32xf32, #tpu.memory_space<vmem>>, vector<32x32xf32>
    %c0_1 = arith.constant 0 : index
    %c0_2 = arith.constant 0 : index
    %1 = vector.load %arg3[%c0_1, %c0_2] : memref<1x32xf32, #tpu.memory_space<vmem>>, vector<1x32xf32>
    %2 = vector.broadcast %1 : vector<1x32xf32> to vector<32x32xf32>
    %3 = arith.mulf %0, %2 : vector<32x32xf32>
    %cst = arith.constant dense<0.000000e+00> : vector<32xf32>
    %4 = vector.multi_reduction <add>, %3, %cst [1] : vector<32x32xf32> to vector<32xf32>
    %c0_3 = arith.constant 0 : index
    %5 = memref.load %arg1[%c0_3] : memref<1xf32, #tpu.memory_space<smem>>
    %6 = vector.broadcast %5 : f32 to vector<32xf32>
    %7 = arith.addf %4, %6 : vector<32xf32>
    %8 = arith.negf %7 : vector<32xf32>
    %9 = math.exp %8 : vector<32xf32>
    %cst_4 = arith.constant 1.000000e+00 : f32
    %10 = vector.broadcast %cst_4 : f32 to vector<32xf32>
    %11 = arith.addf %10, %9 : vector<32xf32>
    %12 = arith.divf %10, %11 : vector<32xf32>
    %13 = vector.shape_cast %12 : vector<32xf32> to vector<1x32xf32>
    %c0_5 = arith.constant 0 : index
    %c0_6 = arith.constant 0 : index
    %14 = vector.load %arg4[%c0_5, %c0_6] : memref<1x32xf32, #tpu.memory_space<vmem>>, vector<1x32xf32>
    tpu.vector_store %arg4[%c0_5, %c0_6], %13 {strides = array<i32>} : memref<1x32xf32, #tpu.memory_space<vmem>>, vector<1x32xf32>,
    return
  }
  func.func @transform_0(%arg0: i32) -> i32 {
    %c0_i32 = arith.constant 0 : i32
    %c0_i32_0 = arith.constant 0 : i32
    return %c0_i32 : i32
  }
  func.func @transform_1(%arg0: i32) -> (i32, i32) {
    %c0_i32 = arith.constant 0 : i32
    %c0_i32_0 = arith.constant 0 : i32
    return %arg0, %c0_i32 : i32, i32
  }
  func.func @transform_2(%arg0: i32) -> (i32, i32) {
    %c0_i32 = arith.constant 0 : i32
    %c0_i32_0 = arith.constant 0 : i32
    %c0_i32_1 = arith.constant 0 : i32
    return %c0_i32, %c0_i32_0 : i32, i32
  }
  func.func @transform_3(%arg0: i32) -> (i32, i32) {
    %c0_i32 = arith.constant 0 : i32
    %c0_i32_0 = arith.constant 0 : i32
    return %c0_i32, %arg0 : i32, i32
  }
}

</mosaic_0001>

<llo_original>
// kernel: tpu_custom_call.1
$region0: #{tpu_custom_call.1}
  #allocation0 [shape = 'u32[]', space=smem, size = 0x4, offset = 0x4, fixed_abs, tag = 'smem constant byte address 0x4 - core index']
  #allocation1 [shape = 'u32[144,128]{1,0:T(1,128)}', space=vmem, size = 0x12000, scoped, tag = 'internal scratch']
  #allocation2 [shape = 'f32[1]{0:T(128)S(6)}', space=smem, size = 0x200, scoped, tag = 'scoped memory for tpu_custom_call.1']
  %s0 = inlined_call_operand.<no memory space> [shape: f32[1], index: 0, kind: input, shape index: {}]
  %s1 = inlined_call_operand.hbm [shape: f32[32,32], index: 1, kind: input, shape index: {}]
  %s2 = inlined_call_operand.vmem [shape: f32[1,32], index: 2, kind: input, shape index: {}]
  %s3 = inlined_call_operand.hbm [shape: f32[1,32], index: 3, kind: output, shape index: {}]
  %s4 = sld [smem:[#allocation0]]
  $region26: #{tpu_custom_call.1} parent=0
    _
  %s6 = ssub.s32 1, %s4
  %s7 = scalar_select 0, %s6, %s4
  %8 = sst [smem:[#allocation2]] %s0
  $region1: #{tpu_custom_call.1} parent=0
    #allocation3 [shape = 'u8[16384]{0}', space=vmem, size = 0x4000, scoped, tag = 'input window, operand 1, single buffered']
    #allocation4 [shape = 's32[1]{0}', space=sflag, size = 0x4, scoped, tag = 'scoped memory for tpu_custom_call.1']
    #allocation5 [shape = 's32[1]{0}', space=sflag, size = 0x4, scoped, tag = 'scoped memory for tpu_custom_call.1']
    #allocation6 [shape = 'u8[512]{0}', space=vmem, size = 0x400, scoped, tag = 'output window, operand 0, single buffered']
    %9 = vsyncpa [#allocation4], 0
    %10 = vsyncpa [#allocation5], 0
    // Predicated region
    $region2: #{tpu_custom_call.1} parent=1 // pred_check
      _
    $region3: #{tpu_custom_call.1} parent=1 // pred_check_branch
      %12 = sbr.rel (0) target = $region5
    $region4: #{tpu_custom_call.1} parent=1 // pred_region
      _
    $region5: #{tpu_custom_call.1} parent=1 // pred_fallthru
      _
    // Predicated region
    $region6: #{tpu_custom_call.1} parent=1 // pred_check
      _
    $region7: #{tpu_custom_call.1} parent=1 // pred_check_branch
      %14 = sbr.rel (0) target = $region9
    $region8: #{tpu_custom_call.1} parent=1 // pred_region
      %s16 = ssub.s32 512, 512
      %17 = vsyncadd [#allocation4], %s16
      %s18 = sshll.u32 [#allocation3], 4
      %s19 = int_to_ptr.vmem [resolvable:$true] %s18
      %24 = dma.hbm_to_vmem [thread:$0]  %s1, 512, %s19, [#allocation4], 128, 128, 8
    $region9: #{tpu_custom_call.1} parent=1 // pred_fallthru
      _
    // Predicated region
    $region10: #{tpu_custom_call.1} parent=1 // pred_check
      _
    $region11: #{tpu_custom_call.1} parent=1 // pred_check_branch
      %26 = sbr.rel (0) target = $region13
    $region12: #{tpu_custom_call.1} parent=1 // pred_region
      _
    $region13: #{tpu_custom_call.1} parent=1 // pred_fallthru
      _
    // Predicated region
    $region14: #{tpu_custom_call.1} parent=1 // pred_check
      _
    $region15: #{tpu_custom_call.1} parent=1 // pred_check_branch
      %28 = sbr.rel (0) target = $region17
    $region16: #{tpu_custom_call.1} parent=1 // pred_region
      %29 = dma.done [#allocation4], 512
    $region17: #{tpu_custom_call.1} parent=1 // pred_fallthru
      _
    %v30 = vld [vmem:[#allocation3] sm:$0xff]
    %v31 = vld [vmem:[#allocation3 + $0x8] sm:$0xff]
    %v32 = vld [vmem:[#allocation3 + $0x10] sm:$0xff]
    %v33 = vld [vmem:[#allocation3 + $0x18] sm:$0xff]
    %v34 = vld [vmem:[%s2] sm:$0x1]
    %v36 = vlaneseq
    %v37 = vshrl.u32 %v36, 7
    %v38 = vsub.s32 0, %v37
    %v39 = vrot.slane %v34, %v38
    %v41 = vmul.f32 %v30, %v39
    %v42 = vmul.f32 %v31, %v39
    %v43 = vmul.f32 %v32, %v39
    %v44 = vmul.f32 %v33, %v39
    %vm45 = vcmask 261120
    %v46 = vsel %vm45, %v41, 0.0
    %47 = vadd.xlane.f32.xlu0 %v46
    %v48 = vpop.xlane.xlu0 %47
    %v49 = vsel %vm45, %v42, 0.0
    %50 = vadd.xlane.f32.xlu0 %v49
    %v51 = vpop.xlane.xlu0 %50
    %v52 = vsel %vm45, %v43, 0.0
    %53 = vadd.xlane.f32.xlu0 %v52
    %v54 = vpop.xlane.xlu0 %53
    %v55 = vsel %vm45, %v44, 0.0
    %56 = vadd.xlane.f32.xlu0 %v55
    %v57 = vpop.xlane.xlu0 %56
    %s58 = sld [smem:[#allocation2]]
    %v59 = vstv %s58
    %v60 = vadd.f32 %v48, %v59
    %v61 = vadd.f32 %v51, %v59
    %v62 = vadd.f32 %v54, %v59
    %v63 = vadd.f32 %v57, %v59
    %v64 = vxor.u32 %v60, 2147483648
    %v65 = vxor.u32 %v61, 2147483648
    %v66 = vxor.u32 %v62, 2147483648
    %v67 = vxor.u32 %v63, 2147483648
    %v68 = vmul.f32 %v64, 1.442695
    %v69 = vpow.pop %v68
    %v70 = vmul.f32 %v65, 1.442695
    %v71 = vpow.pop %v70
    %v72 = vmul.f32 %v66, 1.442695
    %v73 = vpow.pop %v72
    %v74 = vmul.f32 %v67, 1.442695
    %v75 = vpow.pop %v74
    %v76 = vadd.f32 %v69, 1.0
    %v77 = vadd.f32 %v71, 1.0
    %v78 = vadd.f32 %v73, 1.0
    %v79 = vadd.f32 %v75, 1.0
    %v80 = vrcp.pop %v76
    %v81 = vmul.f32 1.0, %v80
    %v82 = vrcp.pop %v77
    %v83 = vmul.f32 1.0, %v82
    %v84 = vrcp.pop %v78
    %v85 = vmul.f32 1.0, %v84
    %v86 = vrcp.pop %v79
    %v87 = vmul.f32 1.0, %v86
    %v92 = vlaneseq
    %v93 = vand.u32 %v92, 127
    %v94 = vlaneseq
    %v95 = vshrl.u32 %v94, 7
    %v96 = vsub.s32 %v93, %v95
    %v97 = vrot.slane %v81, %v96
    %v98 = vadd.s32 %v93, 4294967288
    %v99 = vlaneseq
    %v100 = vshrl.u32 %v99, 7
    %v101 = vsub.s32 %v98, %v100
    %v102 = vrot.slane %v83, %v101
    %vm103 = vcmask 130112
    %v104 = vsel %vm103, %v102, %v97
    %v105 = vadd.s32 %v93, 4294967280
    %v106 = vlaneseq
    %v107 = vshrl.u32 %v106, 7
    %v108 = vsub.s32 %v105, %v107
    %v109 = vrot.slane %v85, %v108
    %vm110 = vcmask 195712
    %v111 = vsel %vm110, %v109, %v104
    %v112 = vadd.s32 %v93, 4294967272
    %v113 = vlaneseq
    %v114 = vshrl.u32 %v113, 7
    %v115 = vsub.s32 %v112, %v114
    %v116 = vrot.slane %v87, %v115
    %vm117 = vcmask 261312
    %v118 = vsel %vm117, %v116, %v111
    %vm120 = vcmask 253952
    %121 = vst.msk [vmem:[#allocation6] sm:$0x1] %vm120, %v118
    // Predicated region
    $region18: #{tpu_custom_call.1} parent=1 // pred_check
      _
    $region19: #{tpu_custom_call.1} parent=1 // pred_check_branch
      %123 = sbr.rel (0) target = $region21
    $region20: #{tpu_custom_call.1} parent=1 // pred_region
      %s125 = ssub.s32 16, 16
      %126 = vsyncadd [#allocation5], %s125
      %s128 = sshll.u32 [#allocation6], 4
      %s129 = int_to_ptr.vmem [resolvable:$true] %s128
      %131 = dma.vmem_to_hbm [thread:$0]  %s129, 16, %s3, [#allocation5]
    $region21: #{tpu_custom_call.1} parent=1 // pred_fallthru
      _
    // Predicated region
    $region22: #{tpu_custom_call.1} parent=1 // pred_check
      _
    $region23: #{tpu_custom_call.1} parent=1 // pred_check_branch
      %133 = sbr.rel (0) target = $region25
    $region24: #{tpu_custom_call.1} parent=1 // pred_region
      %134 = dma.done [#allocation5], 16
    $region25: #{tpu_custom_call.1} parent=1 // pred_fallthru
      _
    %135 = vsyncpa [#allocation4], 1
    %136 = vsyncpa [#allocation5], 1

</llo_original>
